<compile_context>
chip_gen: v7x
topology: tpu7x:2x2x1
jax: 0.10.0
libtpu: 0.0.40
codegen_flags: <defaults>
</compile_context>

<pallas_src>
import math

import jax
import jax.numpy as jnp
from jax.experimental import pallas as pl
from jax.experimental.pallas import tpu as pltpu

BN_EPS = 1e-5
LANE = 128
VMEM_LIMIT_BYTES = 32 * 1024 * 1024  # <= scoped default on v6e/v7x, well under physical everywhere


def _round_up(n, m):
    return ((n + m - 1) // m) * m


def _block(h, w, p):
    """One fused Linear -> ReLU -> BatchNorm1d (training-mode batch stats) block.

    h: (B, K) f32 activations (vreg resident)
    w: (K, N) bf16 weights (x @ W layout)
    p: (3, N) f32 packed [bias; gamma; beta]
    """
    b, gamma, beta = p[0:1, :], p[1:2, :], p[2:3, :]
    # bf16 x bf16 matmul with f32 accumulation on the MXU.
    z = jnp.dot(h.astype(jnp.bfloat16), w, preferred_element_type=jnp.float32)
    z = jnp.maximum(z + b, 0.0)                            # bias + ReLU
    mean = jnp.mean(z, axis=0, keepdims=True)              # per-feature batch mean
    diff = z - mean
    var = jnp.mean(diff * diff, axis=0, keepdims=True)     # biased variance (BN train mode)
    scale = gamma * jax.lax.rsqrt(var + BN_EPS)            # fold gamma into inv-std
    return diff * scale + beta                             # Dropout = identity (see TODO)


def _make_kernel(kpad, hpad):
    o1 = kpad
    o2 = kpad + hpad
    o3 = kpad + 2 * hpad

    def kernel(x_ref, w123_ref, p123_ref, w4_ref, p4_ref, o_ref):
        h = x_ref[...]                                     # (B, kpad) f32, lane-dense
        h = _block(h, w123_ref[0:o1, :], p123_ref[0])      # layer 1
        h = _block(h, w123_ref[o1:o2, :], p123_ref[1])     # layer 2
        h = _block(h, w123_ref[o2:o3, :], p123_ref[2])     # layer 3
        o_ref[...] = _block(h, w4_ref[...], p4_ref[...])   # layer 4, lane-dense (B, 512) store

    return kernel


def _vmem_bytes_estimate(B, kpad, hpad, npad):
    in_bytes = (B * kpad * 4                               # x (f32)
                + (kpad + 2 * hpad) * hpad * 2             # w123 (bf16)
                + 3 * 3 * hpad * 4                         # p123 (f32)
                + hpad * npad * 2                          # w4 (bf16)
                + 3 * npad * 4)                            # p4 (f32)
    out_bytes = B * npad * 4
    live_acts = 4 * B * max(hpad, npad) * 4                # z / diff / h temporaries
    return 2 * (in_bytes + out_bytes) + live_acts          # x2 for double-buffering headroom


def tadpole_forward(params, x, num_out_final=500):
    """x: [B, num_input] (after the .squeeze() of the PyTorch module)."""
    w123, p123, w4, p4 = params
    B, k_in = x.shape
    hpad = w123.shape[1]
    kpad = w123.shape[0] - 2 * hpad
    npad = w4.shape[1]

    if k_in < kpad:                                        # lane-dense input (pad contraction dim)
        x = jnp.pad(x, ((0, 0), (0, kpad - k_in)))
    x = x.astype(jnp.float32)

    est = _vmem_bytes_estimate(B, kpad, hpad, npad)
    assert est <= VMEM_LIMIT_BYTES // 2, (
        f"batch {B} too large for single-block kernel (~{est} bytes VMEM); "
        "add a batch grid with two-pass BN statistics")

    out = pl.pallas_call(
        _make_kernel(kpad, hpad),
        out_shape=jax.ShapeDtypeStruct((B, npad), jnp.float32),
        in_specs=[
            pl.BlockSpec(x.shape, lambda: (0, 0)),
            pl.BlockSpec(w123.shape, lambda: (0, 0)),
            pl.BlockSpec(p123.shape, lambda: (0, 0, 0)),
            pl.BlockSpec(w4.shape, lambda: (0, 0)),
            pl.BlockSpec(p4.shape, lambda: (0, 0)),
        ],
        out_specs=pl.BlockSpec((B, npad), lambda: (0, 0)),
        compiler_params=pltpu.CompilerParams(vmem_limit_bytes=VMEM_LIMIT_BYTES),
    )(x, w123, p123, w4, p4)
    return out[:, :num_out_final]                          # cheap XLA slice outside the kernel


def _init_linear(key, fan_in, fan_out, pad_in, pad_out):
    """Deterministic PyTorch-style Linear init (uniform +/- 1/sqrt(fan_in)), zero-padded."""
    kw, kb = jax.random.split(key)
    bound = 1.0 / math.sqrt(fan_in)
    w = jax.random.uniform(kw, (fan_in, fan_out), jnp.float32, -bound, bound)
    b = jax.random.uniform(kb, (fan_out,), jnp.float32, -bound, bound)
    w = jnp.pad(w, ((0, pad_in - fan_in), (0, pad_out - fan_out)))   # padded rows/cols -> 0
    b = jnp.pad(b, ((0, pad_out - fan_out),))
    return w, b


def _pack_bn(bias, real_n, padded_n):
    gamma = jnp.zeros((padded_n,), jnp.float32).at[:real_n].set(1.0)  # padded gamma = 0
    beta = jnp.zeros((padded_n,), jnp.float32)                        # padded beta = 0
    return jnp.stack([bias, gamma, beta], axis=0)                     # (3, N)


def tadpole_init(key, num_input, num_output, final_out=500):
    kpad = _round_up(num_input, LANE)      # 32  -> 128
    hpad = _round_up(num_output, LANE)     # 64  -> 128
    npad = _round_up(final_out, LANE)      # 500 -> 512
    k1, k2, k3, k4 = jax.random.split(key, 4)

    w1, b1 = _init_linear(k1, num_input, num_output, kpad, hpad)
    w2, b2 = _init_linear(k2, num_output, num_output, hpad, hpad)
    w3, b3 = _init_linear(k3, num_output, num_output, hpad, hpad)
    w4, b4 = _init_linear(k4, num_output, final_out, hpad, npad)

    # Consolidated parameter buffers (5 kernel inputs total).
    w123 = jnp.concatenate([w1, w2, w3], axis=0).astype(jnp.bfloat16)  # (kpad + 2*hpad, hpad)
    p123 = jnp.stack([_pack_bn(b1, num_output, hpad),
                      _pack_bn(b2, num_output, hpad),
                      _pack_bn(b3, num_output, hpad)], axis=0)         # (3, 3, hpad) f32
    w4 = w4.astype(jnp.bfloat16)                                       # (hpad, npad)
    p4 = _pack_bn(b4, final_out, npad)                                 # (3, npad) f32
    return (w123, p123, w4, p4)


if __name__ == "__main__":
    key = jax.random.PRNGKey(0)
    k_params, k_x = jax.random.split(key)

    batch = 8
    num_input = 32
    num_output = 64

    params = tadpole_init(k_params, num_input, num_output)

    # PyTorch input would be e.g. [B, num_input, 1, 1]; the module does x.squeeze().
    x = jax.random.normal(k_x, (batch, num_input, 1, 1), jnp.float32)
    x2d = jnp.squeeze(x)                    # -> [B, num_input]

    fwd = jax.jit(tadpole_forward)
    out = fwd(params, x2d)
    out = jax.block_until_ready(out)

    assert out.shape == (batch, 500), out.shape
    assert bool(jnp.all(jnp.isfinite(out))), "non-finite output"
    print("KERNEL_OK")
</pallas_src>

<mosaic_0001>
module attributes {stable_mosaic.version = 11 : i64} {
  func.func @kernel(%arg0: memref<8x128xf32, #tpu.memory_space<vmem>>, %arg1: memref<384x128xbf16, #tpu.memory_space<vmem>>, %arg2: memref<3x3x128xf32, #tpu.memory_space<vmem>>, %arg3: memref<128x512xbf16, #tpu.memory_space<vmem>>, %arg4: memref<3x512xf32, #tpu.memory_space<vmem>>, %arg5: memref<8x512xf32, #tpu.memory_space<vmem>>) attributes {dimension_semantics = [], scalar_prefetch = 0 : i64, scratch_operands = 0 : i64, tpu.core_type = #tpu.core_type<tc>} {
    %c0 = arith.constant 0 : index
    %c0_0 = arith.constant 0 : index
    %0 = vector.load %arg0[%c0, %c0_0] : memref<8x128xf32, #tpu.memory_space<vmem>>, vector<8x128xf32>
    %c0_1 = arith.constant 0 : index
    %c0_2 = arith.constant 0 : index
    %1 = vector.load %arg1[%c0_1, %c0_2] : memref<384x128xbf16, #tpu.memory_space<vmem>>, vector<128x128xbf16>
    %c0_3 = arith.constant 0 : index
    %c0_4 = arith.constant 0 : index
    %c0_5 = arith.constant 0 : index
    %2 = vector.load %arg2[%c0_3, %c0_4, %c0_5] : memref<3x3x128xf32, #tpu.memory_space<vmem>>, vector<1x3x128xf32>
    %3 = vector.shape_cast %2 : vector<1x3x128xf32> to vector<3x128xf32>
    %4 = vector.extract_strided_slice %3 {offsets = [0, 0], sizes = [1, 128], strides = [1, 1]} : vector<3x128xf32> to vector<1x128xf32>
    %5 = vector.extract_strided_slice %3 {offsets = [1, 0], sizes = [1, 128], strides = [1, 1]} : vector<3x128xf32> to vector<1x128xf32>
    %6 = vector.extract_strided_slice %3 {offsets = [2, 0], sizes = [1, 128], strides = [1, 1]} : vector<3x128xf32> to vector<1x128xf32>
    %7 = arith.truncf %0 : vector<8x128xf32> to vector<8x128xbf16>
    %cst = arith.constant dense<0.000000e+00> : vector<8x128xf32>
    %8 = tpu.matmul %7, %1, %cst {dimension_numbers = #tpu.dot_dimension_numbers<[1], [0], [0], [1], [0, 0, 1, 1], [], []>} : vector<8x128xbf16>, vector<128x128xbf16>, vector<8x128xf32> -> vector<8x128xf32>
    %9 = vector.broadcast %4 : vector<1x128xf32> to vector<8x128xf32>
    %10 = arith.addf %8, %9 : vector<8x128xf32>
    %cst_6 = arith.constant 0.000000e+00 : f32
    %11 = vector.broadcast %cst_6 : f32 to vector<8x128xf32>
    %12 = arith.maximumf %10, %11 : vector<8x128xf32>
    %cst_7 = arith.constant dense<0.000000e+00> : vector<128xf32>
    %13 = vector.multi_reduction <add>, %12, %cst_7 [0] : vector<8x128xf32> to vector<128xf32>
    %14 = vector.shape_cast %13 : vector<128xf32> to vector<1x128xf32>
    %cst_8 = arith.constant 8.000000e+00 : f32
    %15 = vector.broadcast %cst_8 : f32 to vector<1x128xf32>
    %16 = arith.divf %14, %15 : vector<1x128xf32>
    %17 = vector.broadcast %16 : vector<1x128xf32> to vector<8x128xf32>
    %18 = arith.subf %12, %17 : vector<8x128xf32>
    %19 = arith.mulf %18, %18 : vector<8x128xf32>
    %cst_9 = arith.constant dense<0.000000e+00> : vector<128xf32>
    %20 = vector.multi_reduction <add>, %19, %cst_9 [0] : vector<8x128xf32> to vector<128xf32>
    %21 = vector.shape_cast %20 : vector<128xf32> to vector<1x128xf32>
    %cst_10 = arith.constant 8.000000e+00 : f32
    %22 = vector.broadcast %cst_10 : f32 to vector<1x128xf32>
    %23 = arith.divf %21, %22 : vector<1x128xf32>
    %cst_11 = arith.constant 9.99999974E-6 : f32
    %24 = vector.broadcast %cst_11 : f32 to vector<1x128xf32>
    %25 = arith.addf %23, %24 : vector<1x128xf32>
    %26 = math.rsqrt %25 : vector<1x128xf32>
    %27 = arith.mulf %5, %26 : vector<1x128xf32>
    %28 = vector.broadcast %27 : vector<1x128xf32> to vector<8x128xf32>
    %29 = arith.mulf %18, %28 : vector<8x128xf32>
    %30 = vector.broadcast %6 : vector<1x128xf32> to vector<8x128xf32>
    %31 = arith.addf %29, %30 : vector<8x128xf32>
    %c128 = arith.constant 128 : index
    %c0_12 = arith.constant 0 : index
    %32 = vector.load %arg1[%c128, %c0_12] : memref<384x128xbf16, #tpu.memory_space<vmem>>, vector<128x128xbf16>
    %c1 = arith.constant 1 : index
    %c0_13 = arith.constant 0 : index
    %c0_14 = arith.constant 0 : index
    %33 = vector.load %arg2[%c1, %c0_13, %c0_14] : memref<3x3x128xf32, #tpu.memory_space<vmem>>, vector<1x3x128xf32>
    %34 = vector.shape_cast %33 : vector<1x3x128xf32> to vector<3x128xf32>
    %35 = vector.extract_strided_slice %34 {offsets = [0, 0], sizes = [1, 128], strides = [1, 1]} : vector<3x128xf32> to vector<1x128xf32>
    %36 = vector.extract_strided_slice %34 {offsets = [1, 0], sizes = [1, 128], strides = [1, 1]} : vector<3x128xf32> to vector<1x128xf32>
    %37 = vector.extract_strided_slice %34 {offsets = [2, 0], sizes = [1, 128], strides = [1, 1]} : vector<3x128xf32> to vector<1x128xf32>
    %38 = arith.truncf %31 : vector<8x128xf32> to vector<8x128xbf16>
    %cst_15 = arith.constant dense<0.000000e+00> : vector<8x128xf32>
    %39 = tpu.matmul %38, %32, %cst_15 {dimension_numbers = #tpu.dot_dimension_numbers<[1], [0], [0], [1], [0, 0, 1, 1], [], []>} : vector<8x128xbf16>, vector<128x128xbf16>, vector<8x128xf32> -> vector<8x128xf32>
    %40 = vector.broadcast %35 : vector<1x128xf32> to vector<8x128xf32>
    %41 = arith.addf %39, %40 : vector<8x128xf32>
    %cst_16 = arith.constant 0.000000e+00 : f32
    %42 = vector.broadcast %cst_16 : f32 to vector<8x128xf32>
    %43 = arith.maximumf %41, %42 : vector<8x128xf32>
    %cst_17 = arith.constant dense<0.000000e+00> : vector<128xf32>
    %44 = vector.multi_reduction <add>, %43, %cst_17 [0] : vector<8x128xf32> to vector<128xf32>
    %45 = vector.shape_cast %44 : vector<128xf32> to vector<1x128xf32>
    %cst_18 = arith.constant 8.000000e+00 : f32
    %46 = vector.broadcast %cst_18 : f32 to vector<1x128xf32>
    %47 = arith.divf %45, %46 : vector<1x128xf32>
    %48 = vector.broadcast %47 : vector<1x128xf32> to vector<8x128xf32>
    %49 = arith.subf %43, %48 : vector<8x128xf32>
    %50 = arith.mulf %49, %49 : vector<8x128xf32>
    %cst_19 = arith.constant dense<0.000000e+00> : vector<128xf32>
    %51 = vector.multi_reduction <add>, %50, %cst_19 [0] : vector<8x128xf32> to vector<128xf32>
    %52 = vector.shape_cast %51 : vector<128xf32> to vector<1x128xf32>
    %cst_20 = arith.constant 8.000000e+00 : f32
    %53 = vector.broadcast %cst_20 : f32 to vector<1x128xf32>
    %54 = arith.divf %52, %53 : vector<1x128xf32>
    %cst_21 = arith.constant 9.99999974E-6 : f32
    %55 = vector.broadcast %cst_21 : f32 to vector<1x128xf32>
    %56 = arith.addf %54, %55 : vector<1x128xf32>
    %57 = math.rsqrt %56 : vector<1x128xf32>
    %58 = arith.mulf %36, %57 : vector<1x128xf32>
    %59 = vector.broadcast %58 : vector<1x128xf32> to vector<8x128xf32>
    %60 = arith.mulf %49, %59 : vector<8x128xf32>
    %61 = vector.broadcast %37 : vector<1x128xf32> to vector<8x128xf32>
    %62 = arith.addf %60, %61 : vector<8x128xf32>
    %c256 = arith.constant 256 : index
    %c0_22 = arith.constant 0 : index
    %63 = vector.load %arg1[%c256, %c0_22] : memref<384x128xbf16, #tpu.memory_space<vmem>>, vector<128x128xbf16>
    %c2 = arith.constant 2 : index
    %c0_23 = arith.constant 0 : index
    %c0_24 = arith.constant 0 : index
    %64 = vector.load %arg2[%c2, %c0_23, %c0_24] : memref<3x3x128xf32, #tpu.memory_space<vmem>>, vector<1x3x128xf32>
    %65 = vector.shape_cast %64 : vector<1x3x128xf32> to vector<3x128xf32>
    %66 = vector.extract_strided_slice %65 {offsets = [0, 0], sizes = [1, 128], strides = [1, 1]} : vector<3x128xf32> to vector<1x128xf32>
    %67 = vector.extract_strided_slice %65 {offsets = [1, 0], sizes = [1, 128], strides = [1, 1]} : vector<3x128xf32> to vector<1x128xf32>
    %68 = vector.extract_strided_slice %65 {offsets = [2, 0], sizes = [1, 128], strides = [1, 1]} : vector<3x128xf32> to vector<1x128xf32>
    %69 = arith.truncf %62 : vector<8x128xf32> to vector<8x128xbf16>
    %cst_25 = arith.constant dense<0.000000e+00> : vector<8x128xf32>
    %70 = tpu.matmul %69, %63, %cst_25 {dimension_numbers = #tpu.dot_dimension_numbers<[1], [0], [0], [1], [0, 0, 1, 1], [], []>} : vector<8x128xbf16>, vector<128x128xbf16>, vector<8x128xf32> -> vector<8x128xf32>
    %71 = vector.broadcast %66 : vector<1x128xf32> to vector<8x128xf32>
    %72 = arith.addf %70, %71 : vector<8x128xf32>
    %cst_26 = arith.constant 0.000000e+00 : f32
    %73 = vector.broadcast %cst_26 : f32 to vector<8x128xf32>
    %74 = arith.maximumf %72, %73 : vector<8x128xf32>
    %cst_27 = arith.constant dense<0.000000e+00> : vector<128xf32>
    %75 = vector.multi_reduction <add>, %74, %cst_27 [0] : vector<8x128xf32> to vector<128xf32>
    %76 = vector.shape_cast %75 : vector<128xf32> to vector<1x128xf32>
    %cst_28 = arith.constant 8.000000e+00 : f32
    %77 = vector.broadcast %cst_28 : f32 to vector<1x128xf32>
    %78 = arith.divf %76, %77 : vector<1x128xf32>
    %79 = vector.broadcast %78 : vector<1x128xf32> to vector<8x128xf32>
    %80 = arith.subf %74, %79 : vector<8x128xf32>
    %81 = arith.mulf %80, %80 : vector<8x128xf32>
    %cst_29 = arith.constant dense<0.000000e+00> : vector<128xf32>
    %82 = vector.multi_reduction <add>, %81, %cst_29 [0] : vector<8x128xf32> to vector<128xf32>
    %83 = vector.shape_cast %82 : vector<128xf32> to vector<1x128xf32>
    %cst_30 = arith.constant 8.000000e+00 : f32
    %84 = vector.broadcast %cst_30 : f32 to vector<1x128xf32>
    %85 = arith.divf %83, %84 : vector<1x128xf32>
    %cst_31 = arith.constant 9.99999974E-6 : f32
    %86 = vector.broadcast %cst_31 : f32 to vector<1x128xf32>
    %87 = arith.addf %85, %86 : vector<1x128xf32>
    %88 = math.rsqrt %87 : vector<1x128xf32>
    %89 = arith.mulf %67, %88 : vector<1x128xf32>
    %90 = vector.broadcast %89 : vector<1x128xf32> to vector<8x128xf32>
    %91 = arith.mulf %80, %90 : vector<8x128xf32>
    %92 = vector.broadcast %68 : vector<1x128xf32> to vector<8x128xf32>
    %93 = arith.addf %91, %92 : vector<8x128xf32>
    %c0_32 = arith.constant 0 : index
    %c0_33 = arith.constant 0 : index
    %94 = vector.load %arg3[%c0_32, %c0_33] : memref<128x512xbf16, #tpu.memory_space<vmem>>, vector<128x512xbf16>
    %c0_34 = arith.constant 0 : index
    %c0_35 = arith.constant 0 : index
    %95 = vector.load %arg4[%c0_34, %c0_35] : memref<3x512xf32, #tpu.memory_space<vmem>>, vector<3x512xf32>
    %96 = vector.extract_strided_slice %95 {offsets = [0, 0], sizes = [1, 512], strides = [1, 1]} : vector<3x512xf32> to vector<1x512xf32>
    %97 = vector.extract_strided_slice %95 {offsets = [1, 0], sizes = [1, 512], strides = [1, 1]} : vector<3x512xf32> to vector<1x512xf32>
    %98 = vector.extract_strided_slice %95 {offsets = [2, 0], sizes = [1, 512], strides = [1, 1]} : vector<3x512xf32> to vector<1x512xf32>
    %99 = arith.truncf %93 : vector<8x128xf32> to vector<8x128xbf16>
    %cst_36 = arith.constant dense<0.000000e+00> : vector<8x512xf32>
    %100 = tpu.matmul %99, %94, %cst_36 {dimension_numbers = #tpu.dot_dimension_numbers<[1], [0], [0], [1], [0, 0, 1, 1], [], []>} : vector<8x128xbf16>, vector<128x512xbf16>, vector<8x512xf32> -> vector<8x512xf32>
    %101 = vector.broadcast %96 : vector<1x512xf32> to vector<8x512xf32>
    %102 = arith.addf %100, %101 : vector<8x512xf32>
    %cst_37 = arith.constant 0.000000e+00 : f32
    %103 = vector.broadcast %cst_37 : f32 to vector<8x512xf32>
    %104 = arith.maximumf %102, %103 : vector<8x512xf32>
    %cst_38 = arith.constant dense<0.000000e+00> : vector<512xf32>
    %105 = vector.multi_reduction <add>, %104, %cst_38 [0] : vector<8x512xf32> to vector<512xf32>
    %106 = vector.shape_cast %105 : vector<512xf32> to vector<1x512xf32>
    %cst_39 = arith.constant 8.000000e+00 : f32
    %107 = vector.broadcast %cst_39 : f32 to vector<1x512xf32>
    %108 = arith.divf %106, %107 : vector<1x512xf32>
    %109 = vector.broadcast %108 : vector<1x512xf32> to vector<8x512xf32>
    %110 = arith.subf %104, %109 : vector<8x512xf32>
    %111 = arith.mulf %110, %110 : vector<8x512xf32>
    %cst_40 = arith.constant dense<0.000000e+00> : vector<512xf32>
    %112 = vector.multi_reduction <add>, %111, %cst_40 [0] : vector<8x512xf32> to vector<512xf32>
    %113 = vector.shape_cast %112 : vector<512xf32> to vector<1x512xf32>
    %cst_41 = arith.constant 8.000000e+00 : f32
    %114 = vector.broadcast %cst_41 : f32 to vector<1x512xf32>
    %115 = arith.divf %113, %114 : vector<1x512xf32>
    %cst_42 = arith.constant 9.99999974E-6 : f32
    %116 = vector.broadcast %cst_42 : f32 to vector<1x512xf32>
    %117 = arith.addf %115, %116 : vector<1x512xf32>
    %118 = math.rsqrt %117 : vector<1x512xf32>
    %119 = arith.mulf %97, %118 : vector<1x512xf32>
    %120 = vector.broadcast %119 : vector<1x512xf32> to vector<8x512xf32>
    %121 = arith.mulf %110, %120 : vector<8x512xf32>
    %122 = vector.broadcast %98 : vector<1x512xf32> to vector<8x512xf32>
    %123 = arith.addf %121, %122 : vector<8x512xf32>
    %c0_43 = arith.constant 0 : index
    %c0_44 = arith.constant 0 : index
    %124 = vector.load %arg5[%c0_43, %c0_44] : memref<8x512xf32, #tpu.memory_space<vmem>>, vector<8x512xf32>
    tpu.vector_store %arg5[%c0_43, %c0_44], %123 {strides = array<i32>} : memref<8x512xf32, #tpu.memory_space<vmem>>, vector<8x512xf32>,
    return
  }
}

</mosaic_0001>

<llo_original>
// kernel: tadpole_forward.1
$region0: #{tadpole_forward.1}
  #allocation0 [shape = 'u32[]', space=smem, size = 0x4, offset = 0x4, fixed_abs, tag = 'smem constant byte address 0x4 - core index']
  #allocation1 [shape = 'u32[144,128]{1,0:T(1,128)}', space=vmem, size = 0x12000, scoped, tag = 'internal scratch']
  %s0 = inlined_call_operand.vmem [shape: f32[8,128], index: 0, kind: input, shape index: {}]
  %s1 = inlined_call_operand.hbm [shape: bf16[384,128], index: 1, kind: input, shape index: {}]
  %s2 = inlined_call_operand.vmem [shape: f32[3,3,128], index: 2, kind: input, shape index: {}]
  %s3 = inlined_call_operand.hbm [shape: bf16[128,512], index: 3, kind: input, shape index: {}]
  %s4 = inlined_call_operand.vmem [shape: f32[3,512], index: 4, kind: input, shape index: {}]
  %s5 = inlined_call_operand.hbm [shape: f32[8,512], index: 5, kind: output, shape index: {}]
  %s6 = sld [smem:[#allocation0]]
  $region38: #{tadpole_forward.1} parent=0
    _
  %s8 = ssub.s32 1, %s6
  %s9 = scalar_select 0, %s8, %s6
  $region1: #{tadpole_forward.1} parent=0
    #allocation2 [shape = 'u8[98304]{0}', space=vmem, size = 0x18000, scoped, tag = 'input window, operand 1, single buffered']
    #allocation3 [shape = 's32[1]{0}', space=sflag, size = 0x4, scoped, tag = 'scoped memory for tadpole_forward.1']
    #allocation4 [shape = 's32[1]{0}', space=sflag, size = 0x4, scoped, tag = 'scoped memory for tadpole_forward.1']
    #allocation5 [shape = 'u8[131072]{0}', space=vmem, size = 0x20000, scoped, tag = 'input window, operand 3, single buffered']
    #allocation6 [shape = 's32[1]{0}', space=sflag, size = 0x4, scoped, tag = 'scoped memory for tadpole_forward.1']
    #allocation7 [shape = 'u8[16384]{0}', space=vmem, size = 0x4000, scoped, tag = 'output window, operand 0, single buffered']
    %10 = vsyncpa [#allocation3], 0
    %11 = vsyncpa [#allocation6], 0
    %12 = vsyncpa [#allocation4], 0
    // Predicated region
    $region2: #{tadpole_forward.1} parent=1 // pred_check
      _
    $region3: #{tadpole_forward.1} parent=1 // pred_check_branch
      %14 = sbr.rel (0) target = $region5
    $region4: #{tadpole_forward.1} parent=1 // pred_region
      _
    $region5: #{tadpole_forward.1} parent=1 // pred_fallthru
      _
    // Predicated region
    $region6: #{tadpole_forward.1} parent=1 // pred_check
      _
    $region7: #{tadpole_forward.1} parent=1 // pred_check_branch
      %16 = sbr.rel (0) target = $region9
    $region8: #{tadpole_forward.1} parent=1 // pred_region
      %s18 = ssub.s32 3072, 3072
      %19 = vsyncadd [#allocation3], %s18
      %s20 = sshll.u32 [#allocation2], 4
      %s21 = int_to_ptr.vmem [resolvable:$true] %s20
      %26 = dma.hbm_to_vmem [thread:$0]  %s1, 3072, %s21, [#allocation3], 64, 64, 4
    $region9: #{tadpole_forward.1} parent=1 // pred_fallthru
      _
    // Predicated region
    $region10: #{tadpole_forward.1} parent=1 // pred_check
      _
    $region11: #{tadpole_forward.1} parent=1 // pred_check_branch
      %28 = sbr.rel (0) target = $region13
    $region12: #{tadpole_forward.1} parent=1 // pred_region
      _
    $region13: #{tadpole_forward.1} parent=1 // pred_fallthru
      _
    // Predicated region
    $region14: #{tadpole_forward.1} parent=1 // pred_check
      _
    $region15: #{tadpole_forward.1} parent=1 // pred_check_branch
      %30 = sbr.rel (0) target = $region17
    $region16: #{tadpole_forward.1} parent=1 // pred_region
      %s32 = ssub.s32 4096, 4096
      %33 = vsyncadd [#allocation6], %s32
      %s34 = sshll.u32 [#allocation5], 4
      %s35 = int_to_ptr.vmem [resolvable:$true] %s34
      %40 = dma.hbm_to_vmem [thread:$0]  %s3, 4096, %s35, [#allocation6], 256, 256, 16
    $region17: #{tadpole_forward.1} parent=1 // pred_fallthru
      _
    // Predicated region
    $region18: #{tadpole_forward.1} parent=1 // pred_check
      _
    $region19: #{tadpole_forward.1} parent=1 // pred_check_branch
      %42 = sbr.rel (0) target = $region21
    $region20: #{tadpole_forward.1} parent=1 // pred_region
      _
    $region21: #{tadpole_forward.1} parent=1 // pred_fallthru
      _
    // Predicated region
    $region22: #{tadpole_forward.1} parent=1 // pred_check
      _
    $region23: #{tadpole_forward.1} parent=1 // pred_check_branch
      %44 = sbr.rel (0) target = $region25
    $region24: #{tadpole_forward.1} parent=1 // pred_region
      %45 = dma.done [#allocation3], 3072
    $region25: #{tadpole_forward.1} parent=1 // pred_fallthru
      _
    // Predicated region
    $region26: #{tadpole_forward.1} parent=1 // pred_check
      _
    $region27: #{tadpole_forward.1} parent=1 // pred_check_branch
      %47 = sbr.rel (0) target = $region29
    $region28: #{tadpole_forward.1} parent=1 // pred_region
      %48 = dma.done [#allocation6], 4096
    $region29: #{tadpole_forward.1} parent=1 // pred_fallthru
      _
    %v50 = vld [vmem:[%s0] sm:$0xff]
    %v51 = vld [vmem:[#allocation2] sm:$0xf]
    %v52 = vld [vmem:[#allocation2 + $0x4] sm:$0xf]
    %v53 = vld [vmem:[#allocation2 + $0x8] sm:$0xf]
    %v54 = vld [vmem:[#allocation2 + $0xc] sm:$0xf]
    %v55 = vld [vmem:[#allocation2 + $0x10] sm:$0xf]
    %v56 = vld [vmem:[#allocation2 + $0x14] sm:$0xf]
    %v57 = vld [vmem:[#allocation2 + $0x18] sm:$0xf]
    %v58 = vld [vmem:[#allocation2 + $0x1c] sm:$0xf]
    %v59 = vld [vmem:[#allocation2 + $0x20] sm:$0xf]
    %v60 = vld [vmem:[#allocation2 + $0x24] sm:$0xf]
    %v61 = vld [vmem:[#allocation2 + $0x28] sm:$0xf]
    %v62 = vld [vmem:[#allocation2 + $0x2c] sm:$0xf]
    %v63 = vld [vmem:[#allocation2 + $0x30] sm:$0xf]
    %v64 = vld [vmem:[#allocation2 + $0x34] sm:$0xf]
    %v65 = vld [vmem:[#allocation2 + $0x38] sm:$0xf]
    %v66 = vld [vmem:[#allocation2 + $0x3c] sm:$0xf]
    %v67 = vld [vmem:[%s2] sm:$0x7]
    %v68 = vpack.c.bf16 %v50, %v50
    %v69 = vlaneseq
    %v70 = vshrl.u32 %v69, 7
    %v71 = vsub.s32 0, %v70
    %v72 = vrot.slane %v67, %v71
    %v89 = vunpack.c.l.b16 %v51
    %v90 = vunpack.c.l.b16 %v52
    %v91 = vunpack.c.l.b16 %v53
    %v92 = vunpack.c.l.b16 %v54
    %v93 = vunpack.c.l.b16 %v55
    %v94 = vunpack.c.l.b16 %v56
    %v95 = vunpack.c.l.b16 %v57
    %v96 = vunpack.c.l.b16 %v58
    %v97 = vunpack.c.l.b16 %v59
    %v98 = vunpack.c.l.b16 %v60
    %v99 = vunpack.c.l.b16 %v61
    %v100 = vunpack.c.l.b16 %v62
    %v101 = vunpack.c.l.b16 %v63
    %v102 = vunpack.c.l.b16 %v64
    %v103 = vunpack.c.l.b16 %v65
    %v104 = vunpack.c.l.b16 %v66
    %v105 = vpack.c.b16 %v90, %v89
    %v106 = vpack.c.b16 %v92, %v91
    %v107 = vpack.c.b16 %v94, %v93
    %v108 = vpack.c.b16 %v96, %v95
    %v109 = vpack.c.b16 %v98, %v97
    %v110 = vpack.c.b16 %v100, %v99
    %v111 = vpack.c.b16 %v102, %v101
    %v112 = vpack.c.b16 %v104, %v103
    %121 = vmatprep.subr.bf16.mxu0 0
    %122 = vmatpush1.bf16.msra.mxu0 %v105
    %123 = vmatprep.subr.bf16.mxu0 0
    %124 = vmatpush1.bf16.msra.mxu0 %v106
    %125 = vmatprep.subr.bf16.mxu0 0
    %126 = vmatpush1.bf16.msra.mxu0 %v107
    %127 = vmatprep.subr.bf16.mxu0 0
    %128 = vmatpush1.bf16.msra.mxu0 %v108
    %129 = vmatprep.subr.bf16.mxu0 0
    %130 = vmatpush1.bf16.msra.mxu0 %v109
    %131 = vmatprep.subr.bf16.mxu0 0
    %132 = vmatpush1.bf16.msra.mxu0 %v110
    %133 = vmatprep.subr.bf16.mxu0 0
    %134 = vmatpush1.bf16.msra.mxu0 %v111
    %135 = vmatprep.subr.bf16.mxu0 0
    %136 = vmatpush1.bf16.msra.mxu0 %v112
    %137 = vmatprep.subr.bf16.mxu0 0
    %138 = vmatpush1.bf16.msra.mxu0 0
    %139 = vmatprep.subr.bf16.mxu0 0
    %140 = vmatpush1.bf16.msra.mxu0 0
    %141 = vmatprep.subr.bf16.mxu0 0
    %142 = vmatpush1.bf16.msra.mxu0 0
    %143 = vmatprep.subr.bf16.mxu0 0
    %144 = vmatpush1.bf16.msra.mxu0 0
    %145 = vmatprep.subr.bf16.mxu0 0
    %146 = vmatpush1.bf16.msra.mxu0 0
    %147 = vmatprep.subr.bf16.mxu0 0
    %148 = vmatpush1.bf16.msra.mxu0 0
    %149 = vmatprep.subr.bf16.mxu0 0
    %150 = vmatpush1.bf16.msra.mxu0 0
    %151 = vmatprep.subr.bf16.mxu0 0
    %152 = vmatpush1.bf16.msra.mxu0 0
    %153 = vmatprep.mubr.bf16.mxu0 0
    %154 = vmatmul.mubr.bf16.gmra.mrb[0].mxu0 %v68
    %v155 = vpop.f32.mrb[0].mxu0
    %v156 = vadd.f32 %v72, %v155
    %v157 = vpop.f32.mrb[0].mxu0
    %v158 = vpop.f32.mrb[0].mxu0
    %v159 = vpop.f32.mrb[0].mxu0
    %160 = vdwg.mxu0
    %v161 = vmax.f32 %v156, 0.0
    %v162 = vrot.slane %v161, 4
    %v163 = vadd.f32 %v161, %v162
    %v164 = vrot.slane %v163, 2
    %v165 = vadd.f32 %v163, %v164
    %v166 = vrot.slane %v165, 1
    %v167 = vadd.f32 %v165, %v166
    %v168 = vrcp.pop 8.0
    %v169 = vmul.f32 %v167, %v168
    %v170 = vsub.f32 %v161, %v169
    %v171 = vmul.f32 %v170, %v170
    %v172 = vrot.slane %v171, 4
    %v173 = vadd.f32 %v171, %v172
    %v174 = vrot.slane %v173, 2
    %v175 = vadd.f32 %v173, %v174
    %v176 = vrot.slane %v175, 1
    %v177 = vadd.f32 %v175, %v176
    %v178 = vmul.f32 %v177, %v168
    %v179 = vadd.f32 %v178, 1e-05
    %v180 = vrsqrt.pop %v179
    %v181 = vmul.f32 %v67, %v180
    %v182 = vlaneseq
    %v183 = vshrl.u32 %v182, 7
    %v184 = vsub.s32 1, %v183
    %v185 = vrot.slane %v181, %v184
    %v186 = vmul.f32 %v170, %v185
    %v187 = vlaneseq
    %v188 = vshrl.u32 %v187, 7
    %v189 = vsub.s32 2, %v188
    %v190 = vrot.slane %v67, %v189
    %v191 = vadd.f32 %v186, %v190
    %v192 = vld [vmem:[#allocation2 + $0x40] sm:$0xf]
    %v193 = vld [vmem:[#allocation2 + $0x44] sm:$0xf]
    %v194 = vld [vmem:[#allocation2 + $0x48] sm:$0xf]
    %v195 = vld [vmem:[#allocation2 + $0x4c] sm:$0xf]
    %v196 = vld [vmem:[#allocation2 + $0x50] sm:$0xf]
    %v197 = vld [vmem:[#allocation2 + $0x54] sm:$0xf]
    %v198 = vld [vmem:[#allocation2 + $0x58] sm:$0xf]
    %v199 = vld [vmem:[#allocation2 + $0x5c] sm:$0xf]
    %v200 = vld [vmem:[#allocation2 + $0x60] sm:$0xf]
    %v201 = vld [vmem:[#allocation2 + $0x64] sm:$0xf]
    %v202 = vld [vmem:[#allocation2 + $0x68] sm:$0xf]
    %v203 = vld [vmem:[#allocation2 + $0x6c] sm:$0xf]
    %v204 = vld [vmem:[#allocation2 + $0x70] sm:$0xf]
    %v205 = vld [vmem:[#allocation2 + $0x74] sm:$0xf]
    %v206 = vld [vmem:[#allocation2 + $0x78] sm:$0xf]
    %v207 = vld [vmem:[#allocation2 + $0x7c] sm:$0xf]
    %s208 = scalar_lea.vmem %s2, 4
    %v209 = vld [vmem:[%s208] sm:$0x7]
    %v210 = vpack.c.bf16 %v191, %v191
    %v211 = vlaneseq
    %v212 = vshrl.u32 %v211, 7
    %v213 = vsub.s32 0, %v212
    %v214 = vrot.slane %v209, %v213
    %v231 = vunpack.c.l.b16 %v192
    %v232 = vunpack.c.l.b16 %v193
    %v233 = vunpack.c.l.b16 %v194
    %v234 = vunpack.c.l.b16 %v195
    %v235 = vunpack.c.l.b16 %v196
    %v236 = vunpack.c.l.b16 %v197
    %v237 = vunpack.c.l.b16 %v198
    %v238 = vunpack.c.l.b16 %v199
    %v239 = vunpack.c.l.b16 %v200
    %v240 = vunpack.c.l.b16 %v201
    %v241 = vunpack.c.l.b16 %v202
    %v242 = vunpack.c.l.b16 %v203
    %v243 = vunpack.c.l.b16 %v204
    %v244 = vunpack.c.l.b16 %v205
    %v245 = vunpack.c.l.b16 %v206
    %v246 = vunpack.c.l.b16 %v207
    %v247 = vpack.c.b16 %v232, %v231
    %v248 = vpack.c.b16 %v234, %v233
    %v249 = vpack.c.b16 %v236, %v235
    %v250 = vpack.c.b16 %v238, %v237
    %v251 = vpack.c.b16 %v240, %v239
    %v252 = vpack.c.b16 %v242, %v241
    %v253 = vpack.c.b16 %v244, %v243
    %v254 = vpack.c.b16 %v246, %v245
    %263 = vmatprep.subr.bf16.mxu0 0
    %264 = vmatpush1.bf16.msra.mxu0 %v247
    %265 = vmatprep.subr.bf16.mxu0 0
    %266 = vmatpush1.bf16.msra.mxu0 %v248
    %267 = vmatprep.subr.bf16.mxu0 0
    %268 = vmatpush1.bf16.msra.mxu0 %v249
    %269 = vmatprep.subr.bf16.mxu0 0
    %270 = vmatpush1.bf16.msra.mxu0 %v250
    %271 = vmatprep.subr.bf16.mxu0 0
    %272 = vmatpush1.bf16.msra.mxu0 %v251
    %273 = vmatprep.subr.bf16.mxu0 0
    %274 = vmatpush1.bf16.msra.mxu0 %v252
    %275 = vmatprep.subr.bf16.mxu0 0
    %276 = vmatpush1.bf16.msra.mxu0 %v253
    %277 = vmatprep.subr.bf16.mxu0 0
    %278 = vmatpush1.bf16.msra.mxu0 %v254
    %279 = vmatprep.subr.bf16.mxu0 0
    %280 = vmatpush1.bf16.msra.mxu0 0
    %281 = vmatprep.subr.bf16.mxu0 0
    %282 = vmatpush1.bf16.msra.mxu0 0
    %283 = vmatprep.subr.bf16.mxu0 0
    %284 = vmatpush1.bf16.msra.mxu0 0
    %285 = vmatprep.subr.bf16.mxu0 0
    %286 = vmatpush1.bf16.msra.mxu0 0
    %287 = vmatprep.subr.bf16.mxu0 0
    %288 = vmatpush1.bf16.msra.mxu0 0
    %289 = vmatprep.subr.bf16.mxu0 0
    %290 = vmatpush1.bf16.msra.mxu0 0
    %291 = vmatprep.subr.bf16.mxu0 0
    %292 = vmatpush1.bf16.msra.mxu0 0
    %293 = vmatprep.subr.bf16.mxu0 0
    %294 = vmatpush1.bf16.msra.mxu0 0
    %295 = vmatprep.mubr.bf16.mxu0 0
    %296 = vmatmul.mubr.bf16.gmra.mrb[0].mxu0 %v210
    %v297 = vpop.f32.mrb[0].mxu0
    %v298 = vadd.f32 %v214, %v297
    %v299 = vpop.f32.mrb[0].mxu0
    %v300 = vpop.f32.mrb[0].mxu0
    %v301 = vpop.f32.mrb[0].mxu0
    %302 = vdwg.mxu0
    %v303 = vmax.f32 %v298, 0.0
    %v304 = vrot.slane %v303, 4
    %v305 = vadd.f32 %v303, %v304
    %v306 = vrot.slane %v305, 2
    %v307 = vadd.f32 %v305, %v306
    %v308 = vrot.slane %v307, 1
    %v309 = vadd.f32 %v307, %v308
    %v310 = vmul.f32 %v309, %v168
    %v311 = vsub.f32 %v303, %v310
    %v312 = vmul.f32 %v311, %v311
    %v313 = vrot.slane %v312, 4
    %v314 = vadd.f32 %v312, %v313
    %v315 = vrot.slane %v314, 2
    %v316 = vadd.f32 %v314, %v315
    %v317 = vrot.slane %v316, 1
    %v318 = vadd.f32 %v316, %v317
    %v319 = vmul.f32 %v318, %v168
    %v320 = vadd.f32 %v319, 1e-05
    %v321 = vrsqrt.pop %v320
    %v322 = vmul.f32 %v209, %v321
    %v323 = vlaneseq
    %v324 = vshrl.u32 %v323, 7
    %v325 = vsub.s32 1, %v324
    %v326 = vrot.slane %v322, %v325
    %v327 = vmul.f32 %v311, %v326
    %v328 = vlaneseq
    %v329 = vshrl.u32 %v328, 7
    %v330 = vsub.s32 2, %v329
    %v331 = vrot.slane %v209, %v330
    %v332 = vadd.f32 %v327, %v331
    %v333 = vld [vmem:[#allocation2 + $0x80] sm:$0xf]
    %v334 = vld [vmem:[#allocation2 + $0x84] sm:$0xf]
    %v335 = vld [vmem:[#allocation2 + $0x88] sm:$0xf]
    %v336 = vld [vmem:[#allocation2 + $0x8c] sm:$0xf]
    %v337 = vld [vmem:[#allocation2 + $0x90] sm:$0xf]
    %v338 = vld [vmem:[#allocation2 + $0x94] sm:$0xf]
    %v339 = vld [vmem:[#allocation2 + $0x98] sm:$0xf]
    %v340 = vld [vmem:[#allocation2 + $0x9c] sm:$0xf]
    %v341 = vld [vmem:[#allocation2 + $0xa0] sm:$0xf]
    %v342 = vld [vmem:[#allocation2 + $0xa4] sm:$0xf]
    %v343 = vld [vmem:[#allocation2 + $0xa8] sm:$0xf]
    %v344 = vld [vmem:[#allocation2 + $0xac] sm:$0xf]
    %v345 = vld [vmem:[#allocation2 + $0xb0] sm:$0xf]
    %v346 = vld [vmem:[#allocation2 + $0xb4] sm:$0xf]
    %v347 = vld [vmem:[#allocation2 + $0xb8] sm:$0xf]
    %v348 = vld [vmem:[#allocation2 + $0xbc] sm:$0xf]
    %s349 = scalar_lea.vmem %s2, 8
    %v350 = vld [vmem:[%s349] sm:$0x7]
    %v351 = vpack.c.bf16 %v332, %v332
    %v352 = vlaneseq
    %v353 = vshrl.u32 %v352, 7
    %v354 = vsub.s32 0, %v353
    %v355 = vrot.slane %v350, %v354
    %v372 = vunpack.c.l.b16 %v333
    %v373 = vunpack.c.l.b16 %v334
    %v374 = vunpack.c.l.b16 %v335
    %v375 = vunpack.c.l.b16 %v336
    %v376 = vunpack.c.l.b16 %v337
    %v377 = vunpack.c.l.b16 %v338
    %v378 = vunpack.c.l.b16 %v339
    %v379 = vunpack.c.l.b16 %v340
    %v380 = vunpack.c.l.b16 %v341
    %v381 = vunpack.c.l.b16 %v342
    %v382 = vunpack.c.l.b16 %v343
    %v383 = vunpack.c.l.b16 %v344
    %v384 = vunpack.c.l.b16 %v345
    %v385 = vunpack.c.l.b16 %v346
    %v386 = vunpack.c.l.b16 %v347
    %v387 = vunpack.c.l.b16 %v348
    %v388 = vpack.c.b16 %v373, %v372
    %v389 = vpack.c.b16 %v375, %v374
    %v390 = vpack.c.b16 %v377, %v376
    %v391 = vpack.c.b16 %v379, %v378
    %v392 = vpack.c.b16 %v381, %v380
    %v393 = vpack.c.b16 %v383, %v382
    %v394 = vpack.c.b16 %v385, %v384
    %v395 = vpack.c.b16 %v387, %v386
    %404 = vmatprep.subr.bf16.mxu0 0
    %405 = vmatpush1.bf16.msra.mxu0 %v388
    %406 = vmatprep.subr.bf16.mxu0 0
    %407 = vmatpush1.bf16.msra.mxu0 %v389
    %408 = vmatprep.subr.bf16.mxu0 0
    %409 = vmatpush1.bf16.msra.mxu0 %v390
    %410 = vmatprep.subr.bf16.mxu0 0
    %411 = vmatpush1.bf16.msra.mxu0 %v391
    %412 = vmatprep.subr.bf16.mxu0 0
    %413 = vmatpush1.bf16.msra.mxu0 %v392
    %414 = vmatprep.subr.bf16.mxu0 0
    %415 = vmatpush1.bf16.msra.mxu0 %v393
    %416 = vmatprep.subr.bf16.mxu0 0
    %417 = vmatpush1.bf16.msra.mxu0 %v394
    %418 = vmatprep.subr.bf16.mxu0 0
    %419 = vmatpush1.bf16.msra.mxu0 %v395
    %420 = vmatprep.subr.bf16.mxu0 0
    %421 = vmatpush1.bf16.msra.mxu0 0
    %422 = vmatprep.subr.bf16.mxu0 0
    %423 = vmatpush1.bf16.msra.mxu0 0
    %424 = vmatprep.subr.bf16.mxu0 0
    %425 = vmatpush1.bf16.msra.mxu0 0
    %426 = vmatprep.subr.bf16.mxu0 0
    %427 = vmatpush1.bf16.msra.mxu0 0
    %428 = vmatprep.subr.bf16.mxu0 0
    %429 = vmatpush1.bf16.msra.mxu0 0
    %430 = vmatprep.subr.bf16.mxu0 0
    %431 = vmatpush1.bf16.msra.mxu0 0
    %432 = vmatprep.subr.bf16.mxu0 0
    %433 = vmatpush1.bf16.msra.mxu0 0
    %434 = vmatprep.subr.bf16.mxu0 0
    %435 = vmatpush1.bf16.msra.mxu0 0
    %436 = vmatprep.mubr.bf16.mxu0 0
    %437 = vmatmul.mubr.bf16.gmra.mrb[0].mxu0 %v351
    %v438 = vpop.f32.mrb[0].mxu0
    %v439 = vadd.f32 %v355, %v438
    %v440 = vpop.f32.mrb[0].mxu0
    %v441 = vpop.f32.mrb[0].mxu0
    %v442 = vpop.f32.mrb[0].mxu0
    %443 = vdwg.mxu0
    %v444 = vmax.f32 %v439, 0.0
    %v445 = vrot.slane %v444, 4
    %v446 = vadd.f32 %v444, %v445
    %v447 = vrot.slane %v446, 2
    %v448 = vadd.f32 %v446, %v447
    %v449 = vrot.slane %v448, 1
    %v450 = vadd.f32 %v448, %v449
    %v451 = vmul.f32 %v450, %v168
    %v452 = vsub.f32 %v444, %v451
    %v453 = vmul.f32 %v452, %v452
    %v454 = vrot.slane %v453, 4
    %v455 = vadd.f32 %v453, %v454
    %v456 = vrot.slane %v455, 2
    %v457 = vadd.f32 %v455, %v456
    %v458 = vrot.slane %v457, 1
    %v459 = vadd.f32 %v457, %v458
    %v460 = vmul.f32 %v459, %v168
    %v461 = vadd.f32 %v460, 1e-05
    %v462 = vrsqrt.pop %v461
    %v463 = vmul.f32 %v350, %v462
    %v464 = vlaneseq
    %v465 = vshrl.u32 %v464, 7
    %v466 = vsub.s32 1, %v465
    %v467 = vrot.slane %v463, %v466
    %v468 = vmul.f32 %v452, %v467
    %v469 = vlaneseq
    %v470 = vshrl.u32 %v469, 7
    %v471 = vsub.s32 2, %v470
    %v472 = vrot.slane %v350, %v471
    %v473 = vadd.f32 %v468, %v472
    %v474 = vld [vmem:[#allocation5] sm:$0xff]
    %v475 = vld [vmem:[#allocation5 + $0x8] sm:$0xff]
    %v476 = vld [vmem:[#allocation5 + $0x10] sm:$0xff]
    %v477 = vld [vmem:[#allocation5 + $0x18] sm:$0xff]
    %v478 = vld [vmem:[#allocation5 + $0x20] sm:$0xff]
    %v479 = vld [vmem:[#allocation5 + $0x28] sm:$0xff]
    %v480 = vld [vmem:[#allocation5 + $0x30] sm:$0xff]
    %v481 = vld [vmem:[#allocation5 + $0x38] sm:$0xff]
    %v482 = vld [vmem:[#allocation5 + $0x40] sm:$0xff]
    %v483 = vld [vmem:[#allocation5 + $0x48] sm:$0xff]
    %v484 = vld [vmem:[#allocation5 + $0x50] sm:$0xff]
    %v485 = vld [vmem:[#allocation5 + $0x58] sm:$0xff]
    %v486 = vld [vmem:[#allocation5 + $0x60] sm:$0xff]
    %v487 = vld [vmem:[#allocation5 + $0x68] sm:$0xff]
    %v488 = vld [vmem:[#allocation5 + $0x70] sm:$0xff]
    %v489 = vld [vmem:[#allocation5 + $0x78] sm:$0xff]
    %v490 = vld [vmem:[#allocation5 + $0x80] sm:$0xff]
    %v491 = vld [vmem:[#allocation5 + $0x88] sm:$0xff]
    %v492 = vld [vmem:[#allocation5 + $0x90] sm:$0xff]
    %v493 = vld [vmem:[#allocation5 + $0x98] sm:$0xff]
    %v494 = vld [vmem:[#allocation5 + $0xa0] sm:$0xff]
    %v495 = vld [vmem:[#allocation5 + $0xa8] sm:$0xff]
    %v496 = vld [vmem:[#allocation5 + $0xb0] sm:$0xff]
    %v497 = vld [vmem:[#allocation5 + $0xb8] sm:$0xff]
    %v498 = vld [vmem:[#allocation5 + $0xc0] sm:$0xff]
    %v499 = vld [vmem:[#allocation5 + $0xc8] sm:$0xff]
    %v500 = vld [vmem:[#allocation5 + $0xd0] sm:$0xff]
    %v501 = vld [vmem:[#allocation5 + $0xd8] sm:$0xff]
    %v502 = vld [vmem:[#allocation5 + $0xe0] sm:$0xff]
    %v503 = vld [vmem:[#allocation5 + $0xe8] sm:$0xff]
    %v504 = vld [vmem:[#allocation5 + $0xf0] sm:$0xff]
    %v505 = vld [vmem:[#allocation5 + $0xf8] sm:$0xff]
    %v506 = vld [vmem:[%s4] sm:$0x77]
    %v507 = vld [vmem:[%s4 + $0x8] sm:$0x77]
    %v508 = vpack.c.bf16 %v473, %v473
    %v511 = vlaneseq
    %v512 = vshrl.u32 %v511, 7
    %v513 = vsub.s32 0, %v512
    %v514 = vrot.slane %v506, %v513
    %v515 = vlaneseq
    %v516 = vshrl.u32 %v515, 7
    %v517 = vsub.s32 4, %v516
    %v518 = vrot.slane %v506, %v517
    %v519 = vlaneseq
    %v520 = vshrl.u32 %v519, 7
    %v521 = vsub.s32 0, %v520
    %v522 = vrot.slane %v507, %v521
    %v523 = vlaneseq
    %v524 = vshrl.u32 %v523, 7
    %v525 = vsub.s32 4, %v524
    %v526 = vrot.slane %v507, %v525
    %v531 = vlaneseq
    %v532 = vshrl.u32 %v531, 7
    %v533 = vsub.s32 0, %v532
    %v534 = vrot.slane %v514, %v533
    %v535 = vlaneseq
    %v536 = vshrl.u32 %v535, 7
    %v537 = vsub.s32 0, %v536
    %v538 = vrot.slane %v518, %v537
    %v539 = vlaneseq
    %v540 = vshrl.u32 %v539, 7
    %v541 = vsub.s32 0, %v540
    %v542 = vrot.slane %v522, %v541
    %v543 = vlaneseq
    %v544 = vshrl.u32 %v543, 7
    %v545 = vsub.s32 0, %v544
    %v546 = vrot.slane %v526, %v545
    %v579 = vunpack.c.l.b16 %v474
    %v580 = vunpack.c.h.b16 %v474
    %v581 = vunpack.c.l.b16 %v475
    %v582 = vunpack.c.h.b16 %v475
    %v583 = vunpack.c.l.b16 %v476
    %v584 = vunpack.c.h.b16 %v476
    %v585 = vunpack.c.l.b16 %v477
    %v586 = vunpack.c.h.b16 %v477
    %v587 = vunpack.c.l.b16 %v478
    %v588 = vunpack.c.h.b16 %v478
    %v589 = vunpack.c.l.b16 %v479
    %v590 = vunpack.c.h.b16 %v479
    %v591 = vunpack.c.l.b16 %v480
    %v592 = vunpack.c.h.b16 %v480
    %v593 = vunpack.c.l.b16 %v481
    %v594 = vunpack.c.h.b16 %v481
    %v595 = vunpack.c.l.b16 %v482
    %v596 = vunpack.c.h.b16 %v482
    %v597 = vunpack.c.l.b16 %v483
    %v598 = vunpack.c.h.b16 %v483
    %v599 = vunpack.c.l.b16 %v484
    %v600 = vunpack.c.h.b16 %v484
    %v601 = vunpack.c.l.b16 %v485
    %v602 = vunpack.c.h.b16 %v485
    %v603 = vunpack.c.l.b16 %v486
    %v604 = vunpack.c.h.b16 %v486
    %v605 = vunpack.c.l.b16 %v487
    %v606 = vunpack.c.h.b16 %v487
    %v607 = vunpack.c.l.b16 %v488
    %v608 = vunpack.c.h.b16 %v488
    %v609 = vunpack.c.l.b16 %v489
    %v610 = vunpack.c.h.b16 %v489
    %v611 = vunpack.c.l.b16 %v490
    %v612 = vunpack.c.h.b16 %v490
    %v613 = vunpack.c.l.b16 %v491
    %v614 = vunpack.c.h.b16 %v491
    %v615 = vunpack.c.l.b16 %v492
    %v616 = vunpack.c.h.b16 %v492
    %v617 = vunpack.c.l.b16 %v493
    %v618 = vunpack.c.h.b16 %v493
    %v619 = vunpack.c.l.b16 %v494
    %v620 = vunpack.c.h.b16 %v494
    %v621 = vunpack.c.l.b16 %v495
    %v622 = vunpack.c.h.b16 %v495
    %v623 = vunpack.c.l.b16 %v496
    %v624 = vunpack.c.h.b16 %v496
    %v625 = vunpack.c.l.b16 %v497
    %v626 = vunpack.c.h.b16 %v497
    %v627 = vunpack.c.l.b16 %v498
    %v628 = vunpack.c.h.b16 %v498
    %v629 = vunpack.c.l.b16 %v499
    %v630 = vunpack.c.h.b16 %v499
    %v631 = vunpack.c.l.b16 %v500
    %v632 = vunpack.c.h.b16 %v500
    %v633 = vunpack.c.l.b16 %v501
    %v634 = vunpack.c.h.b16 %v501
    %v635 = vunpack.c.l.b16 %v502
    %v636 = vunpack.c.h.b16 %v502
    %v637 = vunpack.c.l.b16 %v503
    %v638 = vunpack.c.h.b16 %v503
    %v639 = vunpack.c.l.b16 %v504
    %v640 = vunpack.c.h.b16 %v504
    %v641 = vunpack.c.l.b16 %v505
    %v642 = vunpack.c.h.b16 %v505
    %v643 = vpack.c.b16 %v583, %v579
    %v644 = vpack.c.b16 %v584, %v580
    %v645 = vpack.c.b16 %v585, %v581
    %v646 = vpack.c.b16 %v586, %v582
    %v647 = vpack.c.b16 %v591, %v587
    %v648 = vpack.c.b16 %v592, %v588
    %v649 = vpack.c.b16 %v593, %v589
    %v650 = vpack.c.b16 %v594, %v590
    %v651 = vpack.c.b16 %v599, %v595
    %v652 = vpack.c.b16 %v600, %v596
    %v653 = vpack.c.b16 %v601, %v597
    %v654 = vpack.c.b16 %v602, %v598
    %v655 = vpack.c.b16 %v607, %v603
    %v656 = vpack.c.b16 %v608, %v604
    %v657 = vpack.c.b16 %v609, %v605
    %v658 = vpack.c.b16 %v610, %v606
    %v659 = vpack.c.b16 %v615, %v611
    %v660 = vpack.c.b16 %v616, %v612
    %v661 = vpack.c.b16 %v617, %v613
    %v662 = vpack.c.b16 %v618, %v614
    %v663 = vpack.c.b16 %v623, %v619
    %v664 = vpack.c.b16 %v624, %v620
    %v665 = vpack.c.b16 %v625, %v621
    %v666 = vpack.c.b16 %v626, %v622
    %v667 = vpack.c.b16 %v631, %v627
    %v668 = vpack.c.b16 %v632, %v628
    %v669 = vpack.c.b16 %v633, %v629
    %v670 = vpack.c.b16 %v634, %v630
    %v671 = vpack.c.b16 %v639, %v635
    %v672 = vpack.c.b16 %v640, %v636
    %v673 = vpack.c.b16 %v641, %v637
    %v674 = vpack.c.b16 %v642, %v638
    %707 = vmatprep.subr.bf16.mxu0 %v644
    %708 = vmatpush1.bf16.msra.mxu0 %v643
    %709 = vmatprep.subr.bf16.mxu0 %v648
    %710 = vmatpush1.bf16.msra.mxu0 %v647
    %711 = vmatprep.subr.bf16.mxu0 %v652
    %712 = vmatpush1.bf16.msra.mxu0 %v651
    %713 = vmatprep.subr.bf16.mxu0 %v656
    %714 = vmatpush1.bf16.msra.mxu0 %v655
    %715 = vmatprep.subr.bf16.mxu0 %v660
    %716 = vmatpush1.bf16.msra.mxu0 %v659
    %717 = vmatprep.subr.bf16.mxu0 %v664
    %718 = vmatpush1.bf16.msra.mxu0 %v663
    %719 = vmatprep.subr.bf16.mxu0 %v668
    %720 = vmatpush1.bf16.msra.mxu0 %v667
    %721 = vmatprep.subr.bf16.mxu0 %v672
    %722 = vmatpush1.bf16.msra.mxu0 %v671
    %723 = vmatprep.subr.bf16.mxu0 0
    %724 = vmatpush1.bf16.msra.mxu0 0
    %725 = vmatprep.subr.bf16.mxu0 0
    %726 = vmatpush1.bf16.msra.mxu0 0
    %727 = vmatprep.subr.bf16.mxu0 0
    %728 = vmatpush1.bf16.msra.mxu0 0
    %729 = vmatprep.subr.bf16.mxu0 0
    %730 = vmatpush1.bf16.msra.mxu0 0
    %731 = vmatprep.subr.bf16.mxu0 0
    %732 = vmatpush1.bf16.msra.mxu0 0
    %733 = vmatprep.subr.bf16.mxu0 0
    %734 = vmatpush1.bf16.msra.mxu0 0
    %735 = vmatprep.subr.bf16.mxu0 0
    %736 = vmatpush1.bf16.msra.mxu0 0
    %737 = vmatprep.subr.bf16.mxu0 0
    %738 = vmatpush1.bf16.msra.mxu0 0
    %739 = vmatprep.mubr.bf16.mxu0 0
    %740 = vmatmul.mubr.bf16.gmra.mrb[0].mxu0 %v508
    %v741 = vpop.f32.mrb[0].mxu0
    %v742 = vadd.f32 %v534, %v741
    %v743 = vpop.f32.mrb[0].mxu0
    %v744 = vadd.f32 %v538, %v743
    %v745 = vpop.f32.mrb[0].mxu0
    %v746 = vpop.f32.mrb[0].mxu0
    %747 = vdwg.mxu0
    %748 = vmatprep.subr.bf16.mxu0 %v646
    %749 = vmatpush1.bf16.msra.mxu0 %v645
    %750 = vmatprep.subr.bf16.mxu0 %v650
    %751 = vmatpush1.bf16.msra.mxu0 %v649
    %752 = vmatprep.subr.bf16.mxu0 %v654
    %753 = vmatpush1.bf16.msra.mxu0 %v653
    %754 = vmatprep.subr.bf16.mxu0 %v658
    %755 = vmatpush1.bf16.msra.mxu0 %v657
    %756 = vmatprep.subr.bf16.mxu0 %v662
    %757 = vmatpush1.bf16.msra.mxu0 %v661
    %758 = vmatprep.subr.bf16.mxu0 %v666
    %759 = vmatpush1.bf16.msra.mxu0 %v665
    %760 = vmatprep.subr.bf16.mxu0 %v670
    %761 = vmatpush1.bf16.msra.mxu0 %v669
    %762 = vmatprep.subr.bf16.mxu0 %v674
    %763 = vmatpush1.bf16.msra.mxu0 %v673
    %764 = vmatprep.subr.bf16.mxu0 0
    %765 = vmatpush1.bf16.msra.mxu0 0
    %766 = vmatprep.subr.bf16.mxu0 0
    %767 = vmatpush1.bf16.msra.mxu0 0
    %768 = vmatprep.subr.bf16.mxu0 0
    %769 = vmatpush1.bf16.msra.mxu0 0
    %770 = vmatprep.subr.bf16.mxu0 0
    %771 = vmatpush1.bf16.msra.mxu0 0
    %772 = vmatprep.subr.bf16.mxu0 0
    %773 = vmatpush1.bf16.msra.mxu0 0
    %774 = vmatprep.subr.bf16.mxu0 0
    %775 = vmatpush1.bf16.msra.mxu0 0
    %776 = vmatprep.subr.bf16.mxu0 0
    %777 = vmatpush1.bf16.msra.mxu0 0
    %778 = vmatprep.subr.bf16.mxu0 0
    %779 = vmatpush1.bf16.msra.mxu0 0
    %780 = vmatprep.mubr.bf16.mxu0 0
    %781 = vmatmul.mubr.bf16.gmra.mrb[0].mxu0 %v508
    %v782 = vpop.f32.mrb[0].mxu0
    %v783 = vadd.f32 %v542, %v782
    %v784 = vpop.f32.mrb[0].mxu0
    %v785 = vadd.f32 %v546, %v784
    %v786 = vpop.f32.mrb[0].mxu0
    %v787 = vpop.f32.mrb[0].mxu0
    %788 = vdwg.mxu0
    %v789 = vmax.f32 %v742, 0.0
    %v790 = vmax.f32 %v744, 0.0
    %v791 = vmax.f32 %v783, 0.0
    %v792 = vmax.f32 %v785, 0.0
    %v793 = vrot.slane %v789, 4
    %v794 = vadd.f32 %v789, %v793
    %v795 = vrot.slane %v794, 2
    %v796 = vadd.f32 %v794, %v795
    %v797 = vrot.slane %v796, 1
    %v798 = vadd.f32 %v796, %v797
    %v799 = vrot.slane %v790, 4
    %v800 = vadd.f32 %v790, %v799
    %v801 = vrot.slane %v800, 2
    %v802 = vadd.f32 %v800, %v801
    %v803 = vrot.slane %v802, 1
    %v804 = vadd.f32 %v802, %v803
    %v805 = vrot.slane %v791, 4
    %v806 = vadd.f32 %v791, %v805
    %v807 = vrot.slane %v806, 2
    %v808 = vadd.f32 %v806, %v807
    %v809 = vrot.slane %v808, 1
    %v810 = vadd.f32 %v808, %v809
    %v811 = vrot.slane %v792, 4
    %v812 = vadd.f32 %v792, %v811
    %v813 = vrot.slane %v812, 2
    %v814 = vadd.f32 %v812, %v813
    %v815 = vrot.slane %v814, 1
    %v816 = vadd.f32 %v814, %v815
    %v817 = vmul.f32 %v798, %v168
    %v818 = vmul.f32 %v804, %v168
    %v819 = vmul.f32 %v810, %v168
    %v820 = vmul.f32 %v816, %v168
    %v821 = vsub.f32 %v789, %v817
    %v822 = vsub.f32 %v790, %v818
    %v823 = vsub.f32 %v791, %v819
    %v824 = vsub.f32 %v792, %v820
    %v825 = vmul.f32 %v821, %v821
    %v826 = vmul.f32 %v822, %v822
    %v827 = vmul.f32 %v823, %v823
    %v828 = vmul.f32 %v824, %v824
    %v829 = vrot.slane %v825, 4
    %v830 = vadd.f32 %v825, %v829
    %v831 = vrot.slane %v830, 2
    %v832 = vadd.f32 %v830, %v831
    %v833 = vrot.slane %v832, 1
    %v834 = vadd.f32 %v832, %v833
    %v835 = vrot.slane %v826, 4
    %v836 = vadd.f32 %v826, %v835
    %v837 = vrot.slane %v836, 2
    %v838 = vadd.f32 %v836, %v837
    %v839 = vrot.slane %v838, 1
    %v840 = vadd.f32 %v838, %v839
    %v841 = vrot.slane %v827, 4
    %v842 = vadd.f32 %v827, %v841
    %v843 = vrot.slane %v842, 2
    %v844 = vadd.f32 %v842, %v843
    %v845 = vrot.slane %v844, 1
    %v846 = vadd.f32 %v844, %v845
    %v847 = vrot.slane %v828, 4
    %v848 = vadd.f32 %v828, %v847
    %v849 = vrot.slane %v848, 2
    %v850 = vadd.f32 %v848, %v849
    %v851 = vrot.slane %v850, 1
    %v852 = vadd.f32 %v850, %v851
    %v853 = vmul.f32 %v834, %v168
    %v854 = vmul.f32 %v840, %v168
    %v855 = vmul.f32 %v846, %v168
    %v856 = vmul.f32 %v852, %v168
    %v857 = vadd.f32 %v853, 1e-05
    %v858 = vadd.f32 %v854, 1e-05
    %v859 = vadd.f32 %v855, 1e-05
    %v860 = vadd.f32 %v856, 1e-05
    %v861 = vrsqrt.pop %v857
    %v862 = vrsqrt.pop %v858
    %v863 = vrsqrt.pop %v859
    %v864 = vrsqrt.pop %v860
    %v869 = vcombine.low %v861, %v862
    %v870 = vcombine.low %v863, %v864
    %v871 = vrot.slane %v869, 7
    %v872 = vrot.slane %v870, 7
    %v875 = vmul.f32 %v506, %v871
    %v876 = vmul.f32 %v507, %v872
    %v879 = vlaneseq
    %v880 = vshrl.u32 %v879, 7
    %v881 = vsub.s32 1, %v880
    %v882 = vrot.slane %v875, %v881
    %v883 = vlaneseq
    %v884 = vshrl.u32 %v883, 7
    %v885 = vsub.s32 5, %v884
    %v886 = vrot.slane %v875, %v885
    %v887 = vlaneseq
    %v888 = vshrl.u32 %v887, 7
    %v889 = vsub.s32 1, %v888
    %v890 = vrot.slane %v876, %v889
    %v891 = vlaneseq
    %v892 = vshrl.u32 %v891, 7
    %v893 = vsub.s32 5, %v892
    %v894 = vrot.slane %v876, %v893
    %v899 = vlaneseq
    %v900 = vshrl.u32 %v899, 7
    %v901 = vsub.s32 1, %v900
    %v902 = vrot.slane %v882, %v901
    %v903 = vlaneseq
    %v904 = vshrl.u32 %v903, 7
    %v905 = vsub.s32 1, %v904
    %v906 = vrot.slane %v886, %v905
    %v907 = vlaneseq
    %v908 = vshrl.u32 %v907, 7
    %v909 = vsub.s32 1, %v908
    %v910 = vrot.slane %v890, %v909
    %v911 = vlaneseq
    %v912 = vshrl.u32 %v911, 7
    %v913 = vsub.s32 1, %v912
    %v914 = vrot.slane %v894, %v913
    %v915 = vmul.f32 %v821, %v902
    %v916 = vmul.f32 %v822, %v906
    %v917 = vmul.f32 %v823, %v910
    %v918 = vmul.f32 %v824, %v914
    %v919 = vlaneseq
    %v920 = vshrl.u32 %v919, 7
    %v921 = vsub.s32 2, %v920
    %v922 = vrot.slane %v506, %v921
    %v923 = vlaneseq
    %v924 = vshrl.u32 %v923, 7
    %v925 = vsub.s32 6, %v924
    %v926 = vrot.slane %v506, %v925
    %v927 = vlaneseq
    %v928 = vshrl.u32 %v927, 7
    %v929 = vsub.s32 2, %v928
    %v930 = vrot.slane %v507, %v929
    %v931 = vlaneseq
    %v932 = vshrl.u32 %v931, 7
    %v933 = vsub.s32 6, %v932
    %v934 = vrot.slane %v507, %v933
    %v939 = vlaneseq
    %v940 = vshrl.u32 %v939, 7
    %v941 = vsub.s32 2, %v940
    %v942 = vrot.slane %v922, %v941
    %v943 = vlaneseq
    %v944 = vshrl.u32 %v943, 7
    %v945 = vsub.s32 2, %v944
    %v946 = vrot.slane %v926, %v945
    %v947 = vlaneseq
    %v948 = vshrl.u32 %v947, 7
    %v949 = vsub.s32 2, %v948
    %v950 = vrot.slane %v930, %v949
    %v951 = vlaneseq
    %v952 = vshrl.u32 %v951, 7
    %v953 = vsub.s32 2, %v952
    %v954 = vrot.slane %v934, %v953
    %v955 = vadd.f32 %v915, %v942
    %v956 = vadd.f32 %v916, %v946
    %v957 = vadd.f32 %v917, %v950
    %v958 = vadd.f32 %v918, %v954
    %959 = vst [vmem:[#allocation7] sm:$0xff] %v955
    %960 = vst [vmem:[#allocation7 + $0x8] sm:$0xff] %v956
    %961 = vst [vmem:[#allocation7 + $0x10] sm:$0xff] %v957
    %962 = vst [vmem:[#allocation7 + $0x18] sm:$0xff] %v958
    // Predicated region
    $region30: #{tadpole_forward.1} parent=1 // pred_check
      _
    $region31: #{tadpole_forward.1} parent=1 // pred_check_branch
      %964 = sbr.rel (0) target = $region33
    $region32: #{tadpole_forward.1} parent=1 // pred_region
      %s966 = ssub.s32 512, 512
      %967 = vsyncadd [#allocation4], %s966
      %s969 = sshll.u32 [#allocation7], 4
      %s970 = int_to_ptr.vmem [resolvable:$true] %s969
      %972 = dma.vmem_to_hbm [thread:$0]  %s970, 512, %s5, [#allocation4]
    $region33: #{tadpole_forward.1} parent=1 // pred_fallthru
      _
    // Predicated region
    $region34: #{tadpole_forward.1} parent=1 // pred_check
      _
    $region35: #{tadpole_forward.1} parent=1 // pred_check_branch
      %974 = sbr.rel (0) target = $region37
    $region36: #{tadpole_forward.1} parent=1 // pred_region
      %975 = dma.done [#allocation4], 512
    $region37: #{tadpole_forward.1} parent=1 // pred_fallthru
      _
    %976 = vsyncpa [#allocation3], 1
    %977 = vsyncpa [#allocation6], 1
    %978 = vsyncpa [#allocation4], 1

</llo_original>
